<compile_context>
chip_gen: v5e
topology: v5e:2x2
jax: 0.10.0
libtpu: 0.0.40
codegen_flags: <defaults>
</compile_context>

<pallas_src>
import functools

import jax
import jax.numpy as jnp
from jax.experimental import pallas as pl
from jax.experimental.pallas import tpu as pltpu


def _st_gcn_kernel(x_ref, wbig_ref, bbig_ref, h1_ref, bigA_ref,
                   wts_ref, bt_ref, o_ref, *, C_out, K, kt, pad, V):
    """One grid step = one batch element; all activations are (C, T*V) slabs.

    x_ref    : (1, C_in, T*V)            lane-dense input slab
    wbig_ref : (K*C_out + C_out, C_in)   [BN1-scaled gcn conv ; BNr-scaled residual conv]
    bbig_ref : (K*C_out + C_out, 1)      matching biases (residual rows include BNr shift)
    h1_ref   : (C_out, 1)                BN1 shift (applied after graph aggregation)
    bigA_ref : (K, T*V, T*V)             kron(I_T, A[k]) lane-space aggregation operators
    wts_ref  : (kt*C_out, C_out)         BN2-scaled temporal taps, stacked over dt
    bt_ref   : (C_out, 1)                folded temporal bias: s2*bt + h2
    o_ref    : (1, C_out, T*V)           output slab
    """
    x = x_ref[0]                                                   # (C_in, TV)
    TV = x.shape[-1]

    # ---- 1x1 gcn conv (K branches) + residual 1x1 conv: one stacked matmul ----
    ybig = jnp.dot(wbig_ref[...], x,
                   preferred_element_type=jnp.float32) + bbig_ref[...]
    res = ybig[K * C_out:(K + 1) * C_out, :]                       # residual branch

    # ---- graph aggregation: z = sum_k Y_k @ kron(I_T, A[k]) (lane space) ----
    z = jnp.zeros_like(res)
    for k in range(K):                                             # K is small (3)
        z = z + jnp.dot(ybig[k * C_out:(k + 1) * C_out, :], bigA_ref[k],
                        preferred_element_type=jnp.float32)
    z = jnp.maximum(z + h1_ref[...], 0.0)                          # BN1 shift + ReLU

    # ---- temporal (kt x 1) conv: stacked channel matmul + lane roll per tap ----
    p_all = jnp.dot(wts_ref[...], z, preferred_element_type=jnp.float32)
    lane = jax.lax.broadcasted_iota(jnp.int32, (C_out, TV), 1)     # lane index
    acc = res + bt_ref[...]
    for dt in range(kt):                                           # kt is small (3)
        p_dt = p_all[dt * C_out:(dt + 1) * C_out, :]
        off = (pad - dt) * V                                       # temporal offset in lanes
        if off == 0:                                               # center tap
            acc = acc + p_dt
        else:
            # Shift along lanes (XLU rotate, off the MXU/VPU critical path),
            # then zero the lanes that correspond to the zero-padded timesteps.
            shifted = pltpu.roll(p_dt, shift=off % TV, axis=1)
            if off > 0:
                valid = lane >= off            # t < off//V came from left padding
            else:
                valid = lane < TV + off        # t >= T+off//V came from right padding
            acc = acc + jnp.where(valid, shifted, 0.0)

    o_ref[0] = jnp.maximum(acc, 0.0).astype(o_ref.dtype)           # final ReLU


@jax.jit
def st_gcn_forward(x, A, p):
    """Fused Pallas forward of the st_gcn block (inference BN, dropout p=0)."""
    N, C_in, T, V = x.shape
    K = A.shape[0]
    kt, C_out, _ = p["wt"].shape
    pad = (kt - 1) // 2
    TV = T * V
    f32 = jnp.float32

    # ---- host-side folding (cheap XLA ops, once per call) ----
    wg_s = p["wg"] * jnp.tile(p["s1"], (K, 1))       # BN1 scale into gcn conv
    bg_s = p["bg"] * jnp.tile(p["s1"], (K, 1))
    wr_s = p["wr"] * p["sr"]                         # BNr scale into residual conv
    br_e = p["br"] * p["sr"] + p["hr"]
    wbig = jnp.concatenate([wg_s, wr_s], axis=0)     # (K*C_out + C_out, C_in)
    bbig = jnp.concatenate([bg_s, br_e], axis=0)     # (K*C_out + C_out, 1)
    wts = (p["wt"] * p["s2"][None]).reshape(kt * C_out, C_out)   # BN2 scale into taps
    bt_e = p["bt"] * p["s2"] + p["h2"]

    # Lane-space graph-aggregation operators: act on the flattened (t, v) lane
    # index, so in-kernel the aggregation is a plain 2-D MXU matmul.
    eyeT = jnp.eye(T, dtype=f32)
    bigA = jnp.stack([jnp.kron(eyeT, A[k].astype(f32)) for k in range(K)])  # (K, TV, TV)

    x_flat = x.reshape(N, C_in, TV)                  # lane-dense activations

    kernel = functools.partial(_st_gcn_kernel, C_out=C_out, K=K, kt=kt,
                               pad=pad, V=V)

    def const_spec(a):                               # whole array, same block every step
        zeros = (0,) * a.ndim
        return pl.BlockSpec(a.shape, lambda n, _z=zeros: _z)

    out_flat = pl.pallas_call(
        kernel,
        out_shape=jax.ShapeDtypeStruct((N, C_out, TV), x.dtype),
        grid=(N,),
        in_specs=[
            pl.BlockSpec((1, C_in, TV), lambda n: (n, 0, 0)),    # x (lane-dense)
            const_spec(wbig), const_spec(bbig), const_spec(p["h1"]),
            const_spec(bigA), const_spec(wts), const_spec(bt_e),
        ],
        out_specs=pl.BlockSpec((1, C_out, TV), lambda n: (n, 0, 0)),
        compiler_params=pltpu.CompilerParams(
            dimension_semantics=("parallel",)),      # lets v7x use both TCs over N
    )(x_flat, wbig, bbig, p["h1"], bigA, wts, bt_e)

    return out_flat.reshape(N, C_out, T, V)


def init_params(key, C_in, C_out, K, kt):
    """Deterministic synthetic parameters (shapes follow the PyTorch module)."""
    ks = jax.random.split(key, 20)
    f = lambda k, shape, s=0.2: (s * jax.random.normal(k, shape)).astype(jnp.float32)
    eps = 1e-5

    def bn_fold(kg, kb, km, kv):
        gamma = 1.0 + f(kg, (C_out, 1))
        beta = f(kb, (C_out, 1))
        mean = f(km, (C_out, 1))
        var = 0.5 + jax.random.uniform(kv, (C_out, 1), dtype=jnp.float32)
        scale = gamma / jnp.sqrt(var + eps)
        shift = beta - mean * scale
        return scale, shift

    p = {}
    # gcn: Conv2d(C_in, C_out*K, kernel=(1,1))
    p["wg"] = f(ks[0], (K * C_out, C_in))
    p["bg"] = f(ks[1], (K * C_out, 1))
    # tcn: BN1 -> ReLU -> Conv2d(C_out, C_out, (kt,1), pad) -> BN2 -> Dropout(0)
    p["s1"], p["h1"] = bn_fold(ks[2], ks[3], ks[4], ks[5])
    p["wt"] = f(ks[6], (kt, C_out, C_out))           # [dt, c_out, c_in]
    p["bt"] = f(ks[7], (C_out, 1))
    p["s2"], p["h2"] = bn_fold(ks[8], ks[9], ks[10], ks[11])
    # residual: Conv2d(C_in, C_out, 1) -> BN
    p["wr"] = f(ks[12], (C_out, C_in))
    p["br"] = f(ks[13], (C_out, 1))
    p["sr"], p["hr"] = bn_fold(ks[14], ks[15], ks[16], ks[17])
    return p


def st_gcn_ref(x, A, p):
    """Pure-JAX reference mirroring the PyTorch forward (inference BN/dropout)."""
    N, C_in, T, V = x.shape
    K = A.shape[0]
    kt, C_out, _ = p["wt"].shape
    pad = (kt - 1) // 2
    hi = jax.lax.Precision.HIGHEST
    r = lambda v: v.reshape(1, -1, 1, 1)

    y = jnp.einsum("oi,nitv->notv", p["wg"], x, precision=hi) + r(p["bg"])
    y = y.reshape(N, K, C_out, T, V)
    z = jnp.einsum("nkctv,kvw->nctw", y, A, precision=hi)
    z = jnp.maximum(z * r(p["s1"]) + r(p["h1"]), 0.0)
    zp = jnp.pad(z, ((0, 0), (0, 0), (pad, pad), (0, 0)))
    out = r(p["bt"])
    for dt in range(kt):
        out = out + jnp.einsum("oi,nitv->notv", p["wt"][dt],
                               zp[:, :, dt:dt + T, :], precision=hi)
    out = out * r(p["s2"]) + r(p["h2"])
    res = jnp.einsum("oi,nitv->notv", p["wr"], x, precision=hi) + r(p["br"])
    res = res * r(p["sr"]) + r(p["hr"])
    return jnp.maximum(out + res, 0.0)


if __name__ == "__main__":
    # small st_gcn(in_channels=8, out_channels=16, kernel_size=(3, 3)), T=8, V=16
    N, C_in, C_out, T, V, K, kt = 2, 8, 16, 8, 16, 3, 3

    key = jax.random.PRNGKey(0)
    kx, ka, kp = jax.random.split(key, 3)
    x = jax.random.normal(kx, (N, C_in, T, V), dtype=jnp.float32)
    A = 0.3 * jax.random.normal(ka, (K, V, V), dtype=jnp.float32)
    params = init_params(kp, C_in, C_out, K, kt)

    out = st_gcn_forward(x, A, params)
    out = jax.block_until_ready(out)

    ref = st_gcn_ref(x, A, params)
    err = float(jnp.max(jnp.abs(out - ref)))
    assert out.shape == (N, C_out, T, V), out.shape
    assert err < 1e-3, f"max abs error {err}"
    print("KERNEL_OK")
</pallas_src>

<mosaic_0001>
module attributes {stable_mosaic.version = 11 : i64} {
  func.func @_st_gcn_kernel(%arg0: i32, %arg1: memref<1x8x128xf32, #tpu.memory_space<vmem>>, %arg2: memref<64x8xf32, #tpu.memory_space<vmem>>, %arg3: memref<64x1xf32, #tpu.memory_space<vmem>>, %arg4: memref<16x1xf32, #tpu.memory_space<vmem>>, %arg5: memref<3x128x128xf32, #tpu.memory_space<vmem>>, %arg6: memref<48x16xf32, #tpu.memory_space<vmem>>, %arg7: memref<16x1xf32, #tpu.memory_space<vmem>>, %arg8: memref<1x16x128xf32, #tpu.memory_space<vmem>>) attributes {dimension_semantics = [#tpu.dimension_semantics<parallel>], iteration_bounds = array<i64: 2>, scalar_prefetch = 0 : i64, scratch_operands = 0 : i64, tpu.core_type = #tpu.core_type<tc>, window_params = [{transform_indices = @transform_0, window_bounds = array<i64: 1, 8, 128>}, {pipeline_mode = #tpu.pipeline_mode<synchronous>, transform_indices = @transform_1, window_bounds = array<i64: 64, 8>}, {pipeline_mode = #tpu.pipeline_mode<synchronous>, transform_indices = @transform_2, window_bounds = array<i64: 64, 1>}, {pipeline_mode = #tpu.pipeline_mode<synchronous>, transform_indices = @transform_3, window_bounds = array<i64: 16, 1>}, {pipeline_mode = #tpu.pipeline_mode<synchronous>, transform_indices = @transform_4, window_bounds = array<i64: 3, 128, 128>}, {pipeline_mode = #tpu.pipeline_mode<synchronous>, transform_indices = @transform_5, window_bounds = array<i64: 48, 16>}, {pipeline_mode = #tpu.pipeline_mode<synchronous>, transform_indices = @transform_6, window_bounds = array<i64: 16, 1>}, {transform_indices = @transform_7, window_bounds = array<i64: 1, 16, 128>}]} {
    %c0 = arith.constant 0 : index
    %c0_0 = arith.constant 0 : index
    %c0_1 = arith.constant 0 : index
    %0 = vector.load %arg1[%c0, %c0_0, %c0_1] : memref<1x8x128xf32, #tpu.memory_space<vmem>>, vector<1x8x128xf32>
    %1 = vector.shape_cast %0 : vector<1x8x128xf32> to vector<8x128xf32>
    %c0_2 = arith.constant 0 : index
    %c0_3 = arith.constant 0 : index
    %2 = vector.load %arg2[%c0_2, %c0_3] : memref<64x8xf32, #tpu.memory_space<vmem>>, vector<64x8xf32>
    %cst = arith.constant dense<0.000000e+00> : vector<64x128xf32>
    %3 = tpu.matmul %2, %1, %cst {dimension_numbers = #tpu.dot_dimension_numbers<[1], [0], [0], [1], [0, 0, 1, 1], [], []>} : vector<64x8xf32>, vector<8x128xf32>, vector<64x128xf32> -> vector<64x128xf32>
    %c0_4 = arith.constant 0 : index
    %c0_5 = arith.constant 0 : index
    %4 = vector.load %arg3[%c0_4, %c0_5] : memref<64x1xf32, #tpu.memory_space<vmem>>, vector<64x1xf32>
    %5 = vector.broadcast %4 : vector<64x1xf32> to vector<64x128xf32>
    %6 = arith.addf %3, %5 : vector<64x128xf32>
    %7 = vector.extract_strided_slice %6 {offsets = [48, 0], sizes = [16, 128], strides = [1, 1]} : vector<64x128xf32> to vector<16x128xf32>
    %cst_6 = arith.constant 0.000000e+00 : f32
    %8 = vector.broadcast %cst_6 : f32 to vector<16x128xf32>
    %9 = vector.extract_strided_slice %6 {offsets = [0, 0], sizes = [16, 128], strides = [1, 1]} : vector<64x128xf32> to vector<16x128xf32>
    %c0_7 = arith.constant 0 : index
    %c0_8 = arith.constant 0 : index
    %c0_9 = arith.constant 0 : index
    %10 = vector.load %arg5[%c0_7, %c0_8, %c0_9] : memref<3x128x128xf32, #tpu.memory_space<vmem>>, vector<1x128x128xf32>
    %11 = vector.shape_cast %10 : vector<1x128x128xf32> to vector<128x128xf32>
    %cst_10 = arith.constant dense<0.000000e+00> : vector<16x128xf32>
    %12 = tpu.matmul %9, %11, %cst_10 {dimension_numbers = #tpu.dot_dimension_numbers<[1], [0], [0], [1], [0, 0, 1, 1], [], []>} : vector<16x128xf32>, vector<128x128xf32>, vector<16x128xf32> -> vector<16x128xf32>
    %13 = arith.addf %8, %12 : vector<16x128xf32>
    %14 = vector.extract_strided_slice %6 {offsets = [16, 0], sizes = [16, 128], strides = [1, 1]} : vector<64x128xf32> to vector<16x128xf32>
    %c1 = arith.constant 1 : index
    %c0_11 = arith.constant 0 : index
    %c0_12 = arith.constant 0 : index
    %15 = vector.load %arg5[%c1, %c0_11, %c0_12] : memref<3x128x128xf32, #tpu.memory_space<vmem>>, vector<1x128x128xf32>
    %16 = vector.shape_cast %15 : vector<1x128x128xf32> to vector<128x128xf32>
    %cst_13 = arith.constant dense<0.000000e+00> : vector<16x128xf32>
    %17 = tpu.matmul %14, %16, %cst_13 {dimension_numbers = #tpu.dot_dimension_numbers<[1], [0], [0], [1], [0, 0, 1, 1], [], []>} : vector<16x128xf32>, vector<128x128xf32>, vector<16x128xf32> -> vector<16x128xf32>
    %18 = arith.addf %13, %17 : vector<16x128xf32>
    %19 = vector.extract_strided_slice %6 {offsets = [32, 0], sizes = [16, 128], strides = [1, 1]} : vector<64x128xf32> to vector<16x128xf32>
    %c2 = arith.constant 2 : index
    %c0_14 = arith.constant 0 : index
    %c0_15 = arith.constant 0 : index
    %20 = vector.load %arg5[%c2, %c0_14, %c0_15] : memref<3x128x128xf32, #tpu.memory_space<vmem>>, vector<1x128x128xf32>
    %21 = vector.shape_cast %20 : vector<1x128x128xf32> to vector<128x128xf32>
    %cst_16 = arith.constant dense<0.000000e+00> : vector<16x128xf32>
    %22 = tpu.matmul %19, %21, %cst_16 {dimension_numbers = #tpu.dot_dimension_numbers<[1], [0], [0], [1], [0, 0, 1, 1], [], []>} : vector<16x128xf32>, vector<128x128xf32>, vector<16x128xf32> -> vector<16x128xf32>
    %23 = arith.addf %18, %22 : vector<16x128xf32>
    %c0_17 = arith.constant 0 : index
    %c0_18 = arith.constant 0 : index
    %24 = vector.load %arg4[%c0_17, %c0_18] : memref<16x1xf32, #tpu.memory_space<vmem>>, vector<16x1xf32>
    %25 = vector.broadcast %24 : vector<16x1xf32> to vector<16x128xf32>
    %26 = arith.addf %23, %25 : vector<16x128xf32>
    %cst_19 = arith.constant 0.000000e+00 : f32
    %27 = vector.broadcast %cst_19 : f32 to vector<16x128xf32>
    %28 = arith.maximumf %26, %27 : vector<16x128xf32>
    %c0_20 = arith.constant 0 : index
    %c0_21 = arith.constant 0 : index
    %29 = vector.load %arg6[%c0_20, %c0_21] : memref<48x16xf32, #tpu.memory_space<vmem>>, vector<48x16xf32>
    %cst_22 = arith.constant dense<0.000000e+00> : vector<48x128xf32>
    %30 = tpu.matmul %29, %28, %cst_22 {dimension_numbers = #tpu.dot_dimension_numbers<[1], [0], [0], [1], [0, 0, 1, 1], [], []>} : vector<48x16xf32>, vector<16x128xf32>, vector<48x128xf32> -> vector<48x128xf32>
    %31 = tpu.iota {dimensions = array<i32: 1>} : vector<16x128xi32>
    %c0_23 = arith.constant 0 : index
    %c0_24 = arith.constant 0 : index
    %32 = vector.load %arg7[%c0_23, %c0_24] : memref<16x1xf32, #tpu.memory_space<vmem>>, vector<16x1xf32>
    %33 = vector.broadcast %32 : vector<16x1xf32> to vector<16x128xf32>
    %34 = arith.addf %7, %33 : vector<16x128xf32>
    %35 = vector.extract_strided_slice %30 {offsets = [0, 0], sizes = [16, 128], strides = [1, 1]} : vector<48x128xf32> to vector<16x128xf32>
    %c16_i32 = arith.constant 16 : i32
    %36 = tpu.dynamic_rotate %35 by %c16_i32 dim 1 : vector<16x128xf32>, i32 -> vector<16x128xf32>
    %c16_i32_25 = arith.constant 16 : i32
    %37 = vector.broadcast %c16_i32_25 : i32 to vector<16x128xi32>
    %38 = arith.cmpi sge, %31, %37 : vector<16x128xi32>
    %cst_26 = arith.constant 0.000000e+00 : f32
    %39 = vector.broadcast %cst_26 : f32 to vector<16x128xf32>
    %40 = arith.select %38, %36, %39 : vector<16x128xi1>, vector<16x128xf32>
    %41 = arith.addf %34, %40 : vector<16x128xf32>
    %42 = vector.extract_strided_slice %30 {offsets = [16, 0], sizes = [16, 128], strides = [1, 1]} : vector<48x128xf32> to vector<16x128xf32>
    %43 = arith.addf %41, %42 : vector<16x128xf32>
    %44 = vector.extract_strided_slice %30 {offsets = [32, 0], sizes = [16, 128], strides = [1, 1]} : vector<48x128xf32> to vector<16x128xf32>
    %c112_i32 = arith.constant 112 : i32
    %45 = tpu.dynamic_rotate %44 by %c112_i32 dim 1 : vector<16x128xf32>, i32 -> vector<16x128xf32>
    %c112_i32_27 = arith.constant 112 : i32
    %46 = vector.broadcast %c112_i32_27 : i32 to vector<16x128xi32>
    %47 = arith.cmpi slt, %31, %46 : vector<16x128xi32>
    %cst_28 = arith.constant 0.000000e+00 : f32
    %48 = vector.broadcast %cst_28 : f32 to vector<16x128xf32>
    %49 = arith.select %47, %45, %48 : vector<16x128xi1>, vector<16x128xf32>
    %50 = arith.addf %43, %49 : vector<16x128xf32>
    %cst_29 = arith.constant 0.000000e+00 : f32
    %51 = vector.broadcast %cst_29 : f32 to vector<16x128xf32>
    %52 = arith.maximumf %50, %51 : vector<16x128xf32>
    %c0_30 = arith.constant 0 : index
    %c0_31 = arith.constant 0 : index
    %c0_32 = arith.constant 0 : index
    %53 = vector.load %arg8[%c0_30, %c0_31, %c0_32] : memref<1x16x128xf32, #tpu.memory_space<vmem>>, vector<1x16x128xf32>
    %54 = vector.shape_cast %53 : vector<1x16x128xf32> to vector<16x128xf32>
    %55 = vector.shape_cast %52 : vector<16x128xf32> to vector<1x16x128xf32>
    tpu.vector_store %arg8[%c0_30, %c0_31, %c0_32], %55 {strides = array<i32>} : memref<1x16x128xf32, #tpu.memory_space<vmem>>, vector<1x16x128xf32>,
    return
  }
  func.func @transform_0(%arg0: i32) -> (i32, i32, i32) {
    %c0_i32 = arith.constant 0 : i32
    %c0_i32_0 = arith.constant 0 : i32
    %c0_i32_1 = arith.constant 0 : i32
    return %arg0, %c0_i32, %c0_i32_0 : i32, i32, i32
  }
  func.func @transform_1(%arg0: i32) -> (i32, i32) {
    %c0_i32 = arith.constant 0 : i32
    %c0_i32_0 = arith.constant 0 : i32
    %c0_i32_1 = arith.constant 0 : i32
    return %c0_i32, %c0_i32_0 : i32, i32
  }
  func.func @transform_2(%arg0: i32) -> (i32, i32) {
    %c0_i32 = arith.constant 0 : i32
    %c0_i32_0 = arith.constant 0 : i32
    %c0_i32_1 = arith.constant 0 : i32
    return %c0_i32, %c0_i32_0 : i32, i32
  }
  func.func @transform_3(%arg0: i32) -> (i32, i32) {
    %c0_i32 = arith.constant 0 : i32
    %c0_i32_0 = arith.constant 0 : i32
    %c0_i32_1 = arith.constant 0 : i32
    return %c0_i32, %c0_i32_0 : i32, i32
  }
  func.func @transform_4(%arg0: i32) -> (i32, i32, i32) {
    %c0_i32 = arith.constant 0 : i32
    %c0_i32_0 = arith.constant 0 : i32
    %c0_i32_1 = arith.constant 0 : i32
    %c0_i32_2 = arith.constant 0 : i32
    return %c0_i32, %c0_i32_0, %c0_i32_1 : i32, i32, i32
  }
  func.func @transform_5(%arg0: i32) -> (i32, i32) {
    %c0_i32 = arith.constant 0 : i32
    %c0_i32_0 = arith.constant 0 : i32
    %c0_i32_1 = arith.constant 0 : i32
    return %c0_i32, %c0_i32_0 : i32, i32
  }
  func.func @transform_6(%arg0: i32) -> (i32, i32) {
    %c0_i32 = arith.constant 0 : i32
    %c0_i32_0 = arith.constant 0 : i32
    %c0_i32_1 = arith.constant 0 : i32
    return %c0_i32, %c0_i32_0 : i32, i32
  }
  func.func @transform_7(%arg0: i32) -> (i32, i32, i32) {
    %c0_i32 = arith.constant 0 : i32
    %c0_i32_0 = arith.constant 0 : i32
    %c0_i32_1 = arith.constant 0 : i32
    return %arg0, %c0_i32, %c0_i32_0 : i32, i32, i32
  }
}

</mosaic_0001>

<llo_original>
// kernel: mul.33
$region0: #{mul.33}
  #allocation0 [shape = 's32[1]{0}', space=sflag, size = 0x4, scoped, tag = 'scoped memory for mul.33']
  %s0 = inlined_call_operand.vmem [shape: f32[48,1], index: 0, kind: input, shape index: {}]
  %s1 = inlined_call_operand.vmem [shape: f32[48,1], index: 1, kind: input, shape index: {}]
  %s2 = inlined_call_operand.vmem [shape: f32[48,1], index: 2, kind: output, shape index: {}]
  %v3 = vld [vmem:[%s0] sm:$0x1]
  %v4 = vld [vmem:[%s1] sm:$0x1]
  %5 = xla_tuple %v3, %v4
  %6 = xla_tuple %5
  %v7 = vmul.f32 %v3, %v4
  %8 = xla_tuple %v7
  %9 = vst [vmem:[%s2] sm:$0x1] %v7

// kernel: mul.43
$region0: #{mul.43}
  #allocation0 [shape = 's32[1]{0}', space=sflag, size = 0x4, scoped, tag = 'scoped memory for mul.43']
  %s0 = inlined_call_operand.vmem [shape: f32[16,1], index: 0, kind: input, shape index: {}]
  %s1 = inlined_call_operand.vmem [shape: f32[16,1], index: 1, kind: input, shape index: {}]
  %s2 = inlined_call_operand.vmem [shape: f32[16,1], index: 2, kind: output, shape index: {}]
  %v3 = vld [vmem:[%s0] sm:$0x1]
  %v4 = vld [vmem:[%s1] sm:$0x1]
  %5 = xla_tuple %v3, %v4
  %6 = xla_tuple %5
  %v7 = vmul.f32 %v3, %v4
  %8 = xla_tuple %v7
  %9 = vst [vmem:[%s2] sm:$0x1] %v7

// kernel: st_gcn_forward.1
$region0: #{st_gcn_forward.1}
  #allocation0 [shape = 'u32[]', space=smem, size = 0x4, offset = 0x4, fixed_abs, tag = 'smem constant byte address 0x4 - core index']
  #allocation1 [shape = 'u32[72,128]{1,0:T(1,128)}', space=vmem, size = 0x9000, scoped, tag = 'internal scratch']
  %s0 = inlined_call_operand.vmem [shape: f32[2,8,128], index: 0, kind: input, shape index: {}]
  %s1 = inlined_call_operand.vmem [shape: f32[64,8], index: 1, kind: input, shape index: {}]
  %s2 = inlined_call_operand.vmem [shape: f32[64,1], index: 2, kind: input, shape index: {}]
  %s3 = inlined_call_operand.vmem [shape: f32[16,1], index: 3, kind: input, shape index: {}]
  %s4 = inlined_call_operand.vmem [shape: f32[3,128,128], index: 4, kind: input, shape index: {}]
  %s5 = inlined_call_operand.vmem [shape: f32[48,16], index: 5, kind: input, shape index: {}]
  %s6 = inlined_call_operand.vmem [shape: f32[16,1], index: 6, kind: input, shape index: {}]
  %s7 = inlined_call_operand.vmem [shape: f32[2,16,128], index: 7, kind: output, shape index: {}]
  %s8 = sld [smem:[#allocation0]]
  $region61: #{st_gcn_forward.1} parent=0
    _
  %s10 = ssub.s32 1, %s8
  %s11 = scalar_select 0, %s10, %s8
  loop: start=0, step=1, limit=4
  $region2: #{st_gcn_forward.1} parent=0 // loop_pre_header
    _
  $region3: #{st_gcn_forward.1} parent=0 // loop_header
    %s13 = sphi 0, %s17
    %p14 = scmp.ge.s32.totalorder %s13, 4
    %s23 = sphi 0, %s25
    %s26 = sphi 0, %s23
    %s27 = sphi 0, %s26
    %s43 = sphi 0, %s27
    %s47 = sphi 0, %s47
    %s49 = sphi 0, %s47
    %s50 = sphi 0, %s49
    %s64 = sphi 0, %s50
    %s68 = sphi 0, %s68
    %s70 = sphi 0, %s68
    %s71 = sphi 0, %s70
    %s85 = sphi 0, %s71
    %s89 = sphi 0, %s89
    %s91 = sphi 0, %s89
    %s92 = sphi 0, %s91
    %s106 = sphi 0, %s92
    %s110 = sphi 0, %s110
    %s112 = sphi 0, %s110
    %s113 = sphi 0, %s112
    %s127 = sphi 0, %s113
    %s131 = sphi 0, %s131
    %s133 = sphi 0, %s131
    %s134 = sphi 0, %s133
    %s148 = sphi 0, %s134
    %s152 = sphi 0, %s152
    %s154 = sphi 0, %s152
    %s155 = sphi 0, %s154
    %s169 = sphi 0, %s155
    %s175 = sphi 0, %s177
    %s178 = sphi 0, %s175
    %s179 = sphi 0, %s178
    %s195 = sphi 0, %s179
  $region4: #{st_gcn_forward.1} parent=0 // loop_header_branch
    %16 = sbr.rel (%p14) target = $region8
  $region5: #{st_gcn_forward.1} parent=0 // loop_body
    %s18 = ssub.s32 %s13, 1
    %s19 = ssub.s32 %s13, 2
    %s20 = sadd.s32 %s13, 1
    %s21 = ssub.s32 %s13, %s20
    %p22 = scmp.eq.s32.totalorder %s21, 0
    %s24 = sadd.s32 %s23, 1
    %s25 = scalar_select %p22, %s23, %s24
    %p28 = pneg %p22
    %p29 = scmp.eq.s32.totalorder %s13, 1
    %p30 = por %p28, %p29
    %p31 = scmp.ne.s32.totalorder %s23, %s26
    %p32 = scmp.eq.s32.totalorder %s13, 0
    %p33 = por %p31, %p32
    %p34 = scmp.ne.s32.totalorder %s23, %s26
    %p35 = scmp.eq.s32.totalorder %s18, 1
    %p36 = por %p34, %p35
    %p37 = scmp.ne.s32.totalorder %s26, %s27
    %p38 = scmp.eq.s32.totalorder %s18, 0
    %p39 = por %p37, %p38
    %p40 = scmp.ne.s32.totalorder %s26, %s27
    %p41 = scmp.eq.s32.totalorder %s19, 1
    %p42 = por %p40, %p41
    %p44 = scmp.ne.s32.totalorder %s27, %s43
    %p45 = scmp.eq.s32.totalorder %s19, 0
    %p46 = por %p44, %p45
    %s48 = sadd.s32 %s47, 1
    %p51 = scmp.eq.s32.totalorder %s13, 1
    %p52 = scmp.ne.s32.totalorder %s47, %s49
    %p53 = scmp.eq.s32.totalorder %s13, 0
    %p54 = por %p52, %p53
    %p55 = scmp.ne.s32.totalorder %s47, %s49
    %p56 = scmp.eq.s32.totalorder %s18, 1
    %p57 = por %p55, %p56
    %p58 = scmp.ne.s32.totalorder %s49, %s50
    %p59 = scmp.eq.s32.totalorder %s18, 0
    %p60 = por %p58, %p59
    %p61 = scmp.ne.s32.totalorder %s49, %s50
    %p62 = scmp.eq.s32.totalorder %s19, 1
    %p63 = por %p61, %p62
    %p65 = scmp.ne.s32.totalorder %s50, %s64
    %p66 = scmp.eq.s32.totalorder %s19, 0
    %p67 = por %p65, %p66
    %s69 = sadd.s32 %s68, 1
    %p72 = scmp.eq.s32.totalorder %s13, 1
    %p73 = scmp.ne.s32.totalorder %s68, %s70
    %p74 = scmp.eq.s32.totalorder %s13, 0
    %p75 = por %p73, %p74
    %p76 = scmp.ne.s32.totalorder %s68, %s70
    %p77 = scmp.eq.s32.totalorder %s18, 1
    %p78 = por %p76, %p77
    %p79 = scmp.ne.s32.totalorder %s70, %s71
    %p80 = scmp.eq.s32.totalorder %s18, 0
    %p81 = por %p79, %p80
    %p82 = scmp.ne.s32.totalorder %s70, %s71
    %p83 = scmp.eq.s32.totalorder %s19, 1
    %p84 = por %p82, %p83
    %p86 = scmp.ne.s32.totalorder %s71, %s85
    %p87 = scmp.eq.s32.totalorder %s19, 0
    %p88 = por %p86, %p87
    %s90 = sadd.s32 %s89, 1
    %p93 = scmp.eq.s32.totalorder %s13, 1
    %p94 = scmp.ne.s32.totalorder %s89, %s91
    %p95 = scmp.eq.s32.totalorder %s13, 0
    %p96 = por %p94, %p95
    %p97 = scmp.ne.s32.totalorder %s89, %s91
    %p98 = scmp.eq.s32.totalorder %s18, 1
    %p99 = por %p97, %p98
    %p100 = scmp.ne.s32.totalorder %s91, %s92
    %p101 = scmp.eq.s32.totalorder %s18, 0
    %p102 = por %p100, %p101
    %p103 = scmp.ne.s32.totalorder %s91, %s92
    %p104 = scmp.eq.s32.totalorder %s19, 1
    %p105 = por %p103, %p104
    %p107 = scmp.ne.s32.totalorder %s92, %s106
    %p108 = scmp.eq.s32.totalorder %s19, 0
    %p109 = por %p107, %p108
    %s111 = sadd.s32 %s110, 1
    %p114 = scmp.eq.s32.totalorder %s13, 1
    %p115 = scmp.ne.s32.totalorder %s110, %s112
    %p116 = scmp.eq.s32.totalorder %s13, 0
    %p117 = por %p115, %p116
    %p118 = scmp.ne.s32.totalorder %s110, %s112
    %p119 = scmp.eq.s32.totalorder %s18, 1
    %p120 = por %p118, %p119
    %p121 = scmp.ne.s32.totalorder %s112, %s113
    %p122 = scmp.eq.s32.totalorder %s18, 0
    %p123 = por %p121, %p122
    %p124 = scmp.ne.s32.totalorder %s112, %s113
    %p125 = scmp.eq.s32.totalorder %s19, 1
    %p126 = por %p124, %p125
    %p128 = scmp.ne.s32.totalorder %s113, %s127
    %p129 = scmp.eq.s32.totalorder %s19, 0
    %p130 = por %p128, %p129
    %s132 = sadd.s32 %s131, 1
    %p135 = scmp.eq.s32.totalorder %s13, 1
    %p136 = scmp.ne.s32.totalorder %s131, %s133
    %p137 = scmp.eq.s32.totalorder %s13, 0
    %p138 = por %p136, %p137
    %p139 = scmp.ne.s32.totalorder %s131, %s133
    %p140 = scmp.eq.s32.totalorder %s18, 1
    %p141 = por %p139, %p140
    %p142 = scmp.ne.s32.totalorder %s133, %s134
    %p143 = scmp.eq.s32.totalorder %s18, 0
    %p144 = por %p142, %p143
    %p145 = scmp.ne.s32.totalorder %s133, %s134
    %p146 = scmp.eq.s32.totalorder %s19, 1
    %p147 = por %p145, %p146
    %p149 = scmp.ne.s32.totalorder %s134, %s148
    %p150 = scmp.eq.s32.totalorder %s19, 0
    %p151 = por %p149, %p150
    %s153 = sadd.s32 %s152, 1
    %p156 = scmp.eq.s32.totalorder %s13, 1
    %p157 = scmp.ne.s32.totalorder %s152, %s154
    %p158 = scmp.eq.s32.totalorder %s13, 0
    %p159 = por %p157, %p158
    %p160 = scmp.ne.s32.totalorder %s152, %s154
    %p161 = scmp.eq.s32.totalorder %s18, 1
    %p162 = por %p160, %p161
    %p163 = scmp.ne.s32.totalorder %s154, %s155
    %p164 = scmp.eq.s32.totalorder %s18, 0
    %p165 = por %p163, %p164
    %p166 = scmp.ne.s32.totalorder %s154, %s155
    %p167 = scmp.eq.s32.totalorder %s19, 1
    %p168 = por %p166, %p167
    %p170 = scmp.ne.s32.totalorder %s155, %s169
    %p171 = scmp.eq.s32.totalorder %s19, 0
    %p172 = por %p170, %p171
    %s173 = ssub.s32 %s13, %s20
    %p174 = scmp.eq.s32.totalorder %s173, 0
    %s176 = sadd.s32 %s175, 1
    %s177 = scalar_select %p174, %s175, %s176
    %p180 = pneg %p174
    %p181 = scmp.eq.s32.totalorder %s13, 1
    %p182 = por %p180, %p181
    %p183 = scmp.ne.s32.totalorder %s175, %s178
    %p184 = scmp.eq.s32.totalorder %s13, 0
    %p185 = por %p183, %p184
    %p186 = scmp.ne.s32.totalorder %s175, %s178
    %p187 = scmp.eq.s32.totalorder %s18, 1
    %p188 = por %p186, %p187
    %p189 = scmp.ne.s32.totalorder %s178, %s179
    %p190 = scmp.eq.s32.totalorder %s18, 0
    %p191 = por %p189, %p190
    %p192 = scmp.ne.s32.totalorder %s178, %s179
    %p193 = scmp.eq.s32.totalorder %s19, 1
    %p194 = por %p192, %p193
    %p196 = scmp.ne.s32.totalorder %s179, %s195
    %p197 = scmp.eq.s32.totalorder %s19, 0
    %p198 = por %p196, %p197
    %p199 = scmp.le.s32.totalorder 1, %s13
    %p200 = scmp.lt.s32.totalorder %s13, 3
    %p201 = pnand %p199, %p200
    %p202 = pneg %p201
    // Predicated region
    $region9: #{st_gcn_forward.1} parent=5 // pred_check
      _
    $region10: #{st_gcn_forward.1} parent=5 // pred_check_branch
      %204 = sbr.rel (%p201) target = $region12
    $region11: #{st_gcn_forward.1} parent=5 // pred_region
      %s205 = ssub.s32 %s13, 1
      // Predicated region
      $region13: #{st_gcn_forward.1} parent=11 // pred_check
        %p206 = pneg %p60
      $region14: #{st_gcn_forward.1} parent=11 // pred_check_branch
        %208 = sbr.rel (%p206) target = $region16
      $region15: #{st_gcn_forward.1} parent=11 // pred_region
        _
      $region16: #{st_gcn_forward.1} parent=11 // pred_fallthru
        _
      // Predicated region
      $region17: #{st_gcn_forward.1} parent=11 // pred_check
        %p209 = pneg %p81
      $region18: #{st_gcn_forward.1} parent=11 // pred_check_branch
        %211 = sbr.rel (%p209) target = $region20
      $region19: #{st_gcn_forward.1} parent=11 // pred_region
        _
      $region20: #{st_gcn_forward.1} parent=11 // pred_fallthru
        _
      // Predicated region
      $region21: #{st_gcn_forward.1} parent=11 // pred_check
        %p212 = pneg %p102
      $region22: #{st_gcn_forward.1} parent=11 // pred_check_branch
        %214 = sbr.rel (%p212) target = $region24
      $region23: #{st_gcn_forward.1} parent=11 // pred_region
        _
      $region24: #{st_gcn_forward.1} parent=11 // pred_fallthru
        _
      // Predicated region
      $region25: #{st_gcn_forward.1} parent=11 // pred_check
        %p215 = pneg %p123
      $region26: #{st_gcn_forward.1} parent=11 // pred_check_branch
        %217 = sbr.rel (%p215) target = $region28
      $region27: #{st_gcn_forward.1} parent=11 // pred_region
        _
      $region28: #{st_gcn_forward.1} parent=11 // pred_fallthru
        _
      // Predicated region
      $region29: #{st_gcn_forward.1} parent=11 // pred_check
        %p218 = pneg %p144
      $region30: #{st_gcn_forward.1} parent=11 // pred_check_branch
        %220 = sbr.rel (%p218) target = $region32
      $region31: #{st_gcn_forward.1} parent=11 // pred_region
        _
      $region32: #{st_gcn_forward.1} parent=11 // pred_fallthru
        _
      // Predicated region
      $region33: #{st_gcn_forward.1} parent=11 // pred_check
        %p221 = pneg %p165
      $region34: #{st_gcn_forward.1} parent=11 // pred_check_branch
        %223 = sbr.rel (%p221) target = $region36
      $region35: #{st_gcn_forward.1} parent=11 // pred_region
        _
      $region36: #{st_gcn_forward.1} parent=11 // pred_fallthru
        _
    $region12: #{st_gcn_forward.1} parent=5 // pred_fallthru
      _
    %p224 = scmp.lt.s32.totalorder %s13, 2
    // Predicated region
    $region37: #{st_gcn_forward.1} parent=5 // pred_check
      %p225 = pneg %p224
    $region38: #{st_gcn_forward.1} parent=5 // pred_check_branch
      %227 = sbr.rel (%p225) target = $region40
    $region39: #{st_gcn_forward.1} parent=5 // pred_region
      // Predicated region
      $region41: #{st_gcn_forward.1} parent=39 // pred_check
        %p228 = pneg %p33
      $region42: #{st_gcn_forward.1} parent=39 // pred_check_branch
        %230 = sbr.rel (%p228) target = $region44
      $region43: #{st_gcn_forward.1} parent=39 // pred_region
        %p231 = scmp.lt.s32.totalorder %s13, 1
        %s232 = scalar_select %p231, %s13, 1
        %s233 = smul.addr %s232, 8
        %s234 = scalar_lea.vmem %s0, %s233
      $region44: #{st_gcn_forward.1} parent=39 // pred_fallthru
        _
    $region40: #{st_gcn_forward.1} parent=5 // pred_fallthru
      _
    %p235 = scmp.le.s32.totalorder 1, %s13
    %p236 = scmp.lt.s32.totalorder %s13, 3
    %p237 = pnand %p235, %p236
    %p238 = pneg %p237
    // Predicated region
    $region45: #{st_gcn_forward.1} parent=5 // pred_check
      _
    $region46: #{st_gcn_forward.1} parent=5 // pred_check_branch
      %240 = sbr.rel (%p237) target = $region48
    $region47: #{st_gcn_forward.1} parent=5 // pred_region
      %s241 = ssub.s32 %s13, 1
      %p242 = scmp.lt.s32.totalorder %s18, 1
      %s243 = scalar_select %p242, %s18, 1
      %s244 = smul.addr %s243, 8
      %s245 = scalar_lea.vmem %s0, %s244
      %p246 = pneg %p39
      %p247 = pneg %p36
      %p248 = pneg %p60
      %p249 = pneg %p57
      %p250 = pneg %p81
      %p251 = pneg %p78
      %p252 = pneg %p102
      %p253 = pneg %p99
      %p254 = pneg %p123
      %p255 = pneg %p120
      %p256 = pneg %p144
      %p257 = pneg %p141
      %p258 = pneg %p165
      %p259 = pneg %p162
      %p260 = pneg %p191
      %p261 = pneg %p188
      %p262 = scmp.lt.s32.totalorder %s18, 1
      %s263 = scalar_select %p262, %s18, 1
      %s264 = smul.addr %s263, 2
      %s265 = smul.addr %s264, 8
      %s266 = scalar_lea.vmem %s7, %s265
      %p267 = scmp.lt.s32.totalorder %s18, 1
      %s268 = scalar_select %p267, %s18, 1
      %s269 = smul.addr %s268, 8
      %s270 = scalar_lea.vmem %s0, %s269
      %p271 = scmp.lt.s32.totalorder %s18, 1
      %s272 = scalar_select %p271, %s18, 1
      %s273 = smul.addr %s272, 2
      %s274 = smul.addr %s273, 8
      %s275 = scalar_lea.vmem %s7, %s274
      %v276 = vld [vmem:[%s270] sm:$0xff]
      %v277 = vld [vmem:[%s1] sm:$0xff]
      %v278 = vld [vmem:[%s1 + $0x8] sm:$0xff]
      %v279 = vld [vmem:[%s1 + $0x10] sm:$0xff]
      %v280 = vld [vmem:[%s1 + $0x18] sm:$0xff]
      %v281 = vld [vmem:[%s1 + $0x20] sm:$0xff]
      %v282 = vld [vmem:[%s1 + $0x28] sm:$0xff]
      %v283 = vld [vmem:[%s1 + $0x30] sm:$0xff]
      %v284 = vld [vmem:[%s1 + $0x38] sm:$0xff]
      %v285 = vld [vmem:[%s2] sm:$0xff]
      %v286 = vld [vmem:[%s2 + $0x8] sm:$0xff]
      %v287 = vld [vmem:[%s2 + $0x10] sm:$0xff]
      %v288 = vld [vmem:[%s2 + $0x18] sm:$0xff]
      %v289 = vld [vmem:[%s2 + $0x20] sm:$0xff]
      %v290 = vld [vmem:[%s2 + $0x28] sm:$0xff]
      %v291 = vld [vmem:[%s2 + $0x30] sm:$0xff]
      %v292 = vld [vmem:[%s2 + $0x38] sm:$0xff]
      %294 = vset.pattern.permute.xlu0 0
      %295 = vperm.xlu0 %294, %v285
      %v296 = vpop.permute.xlu0 %295
      %299 = vset.pattern.permute.xlu0 0
      %300 = vperm.xlu0 %299, %v286
      %v301 = vpop.permute.xlu0 %300
      %304 = vset.pattern.permute.xlu0 0
      %305 = vperm.xlu0 %304, %v287
      %v306 = vpop.permute.xlu0 %305
      %309 = vset.pattern.permute.xlu0 0
      %310 = vperm.xlu0 %309, %v288
      %v311 = vpop.permute.xlu0 %310
      %314 = vset.pattern.permute.xlu0 0
      %315 = vperm.xlu0 %314, %v289
      %v316 = vpop.permute.xlu0 %315
      %319 = vset.pattern.permute.xlu0 0
      %320 = vperm.xlu0 %319, %v290
      %v321 = vpop.permute.xlu0 %320
      %324 = vset.pattern.permute.xlu0 0
      %325 = vperm.xlu0 %324, %v291
      %v326 = vpop.permute.xlu0 %325
      %329 = vset.pattern.permute.xlu0 0
      %330 = vperm.xlu0 %329, %v292
      %v331 = vpop.permute.xlu0 %330
      %vm333 = vcmask 64512
      %v335 = vsel %vm333, %v277, 0
      %v338 = vsel %vm333, %v278, 0
      %v341 = vsel %vm333, %v279, 0
      %v344 = vsel %vm333, %v280, 0
      %v347 = vsel %vm333, %v281, 0
      %v350 = vsel %vm333, %v282, 0
      %v353 = vsel %vm333, %v283, 0
      %v356 = vsel %vm333, %v284, 0
      %358 = vmatpush.msra.mxu0 0.0
      %359 = vmatpush.msra.mxu0 0.0
      %360 = vmatpush.msra.mxu0 0.0
      %361 = vmatpush.msra.mxu0 0.0
      %362 = vmatpush.msra.mxu0 0.0
      %363 = vmatpush.msra.mxu0 0.0
      %364 = vmatpush.msra.mxu0 0.0
      %365 = vmatpush.msra.mxu0 0.0
      %366 = vmatpush.msra.mxu0 0.0
      %367 = vmatpush.msra.mxu0 0.0
      %368 = vmatpush.msra.mxu0 0.0
      %369 = vmatpush.msra.mxu0 0.0
      %370 = vmatpush.msra.mxu0 0.0
      %371 = vmatpush.msra.mxu0 0.0
      %372 = vmatpush.msra.mxu0 0.0
      %373 = vmatpush.msra.mxu0 %v276
      %374 = vmatmul.f32.gmra.mxu0 %v335
      %v375 = vpop.f32.mrf.mxu0
      %v376 = vadd.f32 %v296, %v375
      %377 = vmatmul.f32.gmra.mxu0 %v338
      %v378 = vpop.f32.mrf.mxu0
      %v379 = vadd.f32 %v301, %v378
      %380 = vmatmul.f32.gmra.mxu0 %v341
      %v381 = vpop.f32.mrf.mxu0
      %v382 = vadd.f32 %v306, %v381
      %383 = vmatmul.f32.gmra.mxu0 %v344
      %v384 = vpop.f32.mrf.mxu0
      %v385 = vadd.f32 %v311, %v384
      %386 = vmatmul.f32.gmra.mxu0 %v347
      %v387 = vpop.f32.mrf.mxu0
      %v388 = vadd.f32 %v316, %v387
      %389 = vmatmul.f32.gmra.mxu0 %v350
      %v390 = vpop.f32.mrf.mxu0
      %v391 = vadd.f32 %v321, %v390
      %392 = vmatmul.f32.gmra.mxu0 %v353
      %v393 = vpop.f32.mrf.mxu0
      %v394 = vadd.f32 %v326, %v393
      %395 = vmatmul.f32.gmra.mxu0 %v356
      %v396 = vpop.f32.mrf.mxu0
      %v397 = vadd.f32 %v331, %v396
      %398 = vdwg.mxu0
      %v399 = vld [vmem:[%s4] sm:$0xff]
      %v400 = vld [vmem:[%s4 + $0x8] sm:$0xff]
      %v401 = vld [vmem:[%s4 + $0x10] sm:$0xff]
      %v402 = vld [vmem:[%s4 + $0x18] sm:$0xff]
      %v403 = vld [vmem:[%s4 + $0x20] sm:$0xff]
      %v404 = vld [vmem:[%s4 + $0x28] sm:$0xff]
      %v405 = vld [vmem:[%s4 + $0x30] sm:$0xff]
      %v406 = vld [vmem:[%s4 + $0x38] sm:$0xff]
      %v407 = vld [vmem:[%s4 + $0x40] sm:$0xff]
      %v408 = vld [vmem:[%s4 + $0x48] sm:$0xff]
      %v409 = vld [vmem:[%s4 + $0x50] sm:$0xff]
      %v410 = vld [vmem:[%s4 + $0x58] sm:$0xff]
      %v411 = vld [vmem:[%s4 + $0x60] sm:$0xff]
      %v412 = vld [vmem:[%s4 + $0x68] sm:$0xff]
      %v413 = vld [vmem:[%s4 + $0x70] sm:$0xff]
      %v414 = vld [vmem:[%s4 + $0x78] sm:$0xff]
      %s415 = scalar_lea.vmem %s4, 128
      %v416 = vld [vmem:[%s415] sm:$0xff]
      %v417 = vld [vmem:[%s415 + $0x8] sm:$0xff]
      %v418 = vld [vmem:[%s415 + $0x10] sm:$0xff]
      %v419 = vld [vmem:[%s415 + $0x18] sm:$0xff]
      %v420 = vld [vmem:[%s415 + $0x20] sm:$0xff]
      %v421 = vld [vmem:[%s415 + $0x28] sm:$0xff]
      %v422 = vld [vmem:[%s415 + $0x30] sm:$0xff]
      %v423 = vld [vmem:[%s415 + $0x38] sm:$0xff]
      %v424 = vld [vmem:[%s415 + $0x40] sm:$0xff]
      %v425 = vld [vmem:[%s415 + $0x48] sm:$0xff]
      %v426 = vld [vmem:[%s415 + $0x50] sm:$0xff]
      %v427 = vld [vmem:[%s415 + $0x58] sm:$0xff]
      %v428 = vld [vmem:[%s415 + $0x60] sm:$0xff]
      %v429 = vld [vmem:[%s415 + $0x68] sm:$0xff]
      %v430 = vld [vmem:[%s415 + $0x70] sm:$0xff]
      %v431 = vld [vmem:[%s415 + $0x78] sm:$0xff]
      %432 = vmatpush.msra.mxu0 %v431
      %433 = vmatpush.msra.mxu0 %v430
      %434 = vmatpush.msra.mxu0 %v429
      %435 = vmatpush.msra.mxu0 %v428
      %436 = vmatpush.msra.mxu0 %v427
      %437 = vmatpush.msra.mxu0 %v426
      %438 = vmatpush.msra.mxu0 %v425
      %439 = vmatpush.msra.mxu0 %v424
      %440 = vmatpush.msra.mxu0 %v423
      %441 = vmatpush.msra.mxu0 %v422
      %442 = vmatpush.msra.mxu0 %v421
      %443 = vmatpush.msra.mxu0 %v420
      %444 = vmatpush.msra.mxu0 %v419
      %445 = vmatpush.msra.mxu0 %v418
      %446 = vmatpush.msra.mxu0 %v417
      %447 = vmatpush.msra.mxu0 %v416
      %448 = vmatmul.f32.gmra.mxu0 %v382
      %v449 = vpop.f32.mrf.mxu0
      %v450 = vadd.f32 0.0, %v449
      %451 = vmatmul.f32.gmra.mxu0 %v385
      %v452 = vpop.f32.mrf.mxu0
      %v453 = vadd.f32 0.0, %v452
      %454 = vdwg.mxu0
      %455 = vmatpush.msra.mxu0 %v414
      %456 = vmatpush.msra.mxu0 %v413
      %457 = vmatpush.msra.mxu0 %v412
      %458 = vmatpush.msra.mxu0 %v411
      %459 = vmatpush.msra.mxu0 %v410
      %460 = vmatpush.msra.mxu0 %v409
      %461 = vmatpush.msra.mxu0 %v408
      %462 = vmatpush.msra.mxu0 %v407
      %463 = vmatpush.msra.mxu0 %v406
      %464 = vmatpush.msra.mxu0 %v405
      %465 = vmatpush.msra.mxu0 %v404
      %466 = vmatpush.msra.mxu0 %v403
      %467 = vmatpush.msra.mxu0 %v402
      %468 = vmatpush.msra.mxu0 %v401
      %469 = vmatpush.msra.mxu0 %v400
      %470 = vmatpush.msra.mxu0 %v399
      %471 = vmatmul.f32.gmra.mxu0 %v376
      %v472 = vpop.f32.mrf.mxu0
      %v473 = vadd.f32 %v450, %v472
      %474 = vmatmul.f32.gmra.mxu0 %v379
      %v475 = vpop.f32.mrf.mxu0
      %v476 = vadd.f32 %v453, %v475
      %477 = vdwg.mxu0
      %s478 = scalar_lea.vmem %s4, 256
      %v479 = vld [vmem:[%s478] sm:$0xff]
      %v480 = vld [vmem:[%s478 + $0x8] sm:$0xff]
      %v481 = vld [vmem:[%s478 + $0x10] sm:$0xff]
      %v482 = vld [vmem:[%s478 + $0x18] sm:$0xff]
      %v483 = vld [vmem:[%s478 + $0x20] sm:$0xff]
      %v484 = vld [vmem:[%s478 + $0x28] sm:$0xff]
      %v485 = vld [vmem:[%s478 + $0x30] sm:$0xff]
      %v486 = vld [vmem:[%s478 + $0x38] sm:$0xff]
      %v487 = vld [vmem:[%s478 + $0x40] sm:$0xff]
      %v488 = vld [vmem:[%s478 + $0x48] sm:$0xff]
      %v489 = vld [vmem:[%s478 + $0x50] sm:$0xff]
      %v490 = vld [vmem:[%s478 + $0x58] sm:$0xff]
      %v491 = vld [vmem:[%s478 + $0x60] sm:$0xff]
      %v492 = vld [vmem:[%s478 + $0x68] sm:$0xff]
      %v493 = vld [vmem:[%s478 + $0x70] sm:$0xff]
      %v494 = vld [vmem:[%s478 + $0x78] sm:$0xff]
      %495 = vmatpush.msra.mxu0 %v494
      %496 = vmatpush.msra.mxu0 %v493
      %497 = vmatpush.msra.mxu0 %v492
      %498 = vmatpush.msra.mxu0 %v491
      %499 = vmatpush.msra.mxu0 %v490
      %500 = vmatpush.msra.mxu0 %v489
      %501 = vmatpush.msra.mxu0 %v488
      %502 = vmatpush.msra.mxu0 %v487
      %503 = vmatpush.msra.mxu0 %v486
      %504 = vmatpush.msra.mxu0 %v485
      %505 = vmatpush.msra.mxu0 %v484
      %506 = vmatpush.msra.mxu0 %v483
      %507 = vmatpush.msra.mxu0 %v482
      %508 = vmatpush.msra.mxu0 %v481
      %509 = vmatpush.msra.mxu0 %v480
      %510 = vmatpush.msra.mxu0 %v479
      %511 = vmatmul.f32.gmra.mxu0 %v388
      %v512 = vpop.f32.mrf.mxu0
      %v513 = vadd.f32 0.0, %v512
      %514 = vmatmul.f32.gmra.mxu0 %v391
      %v515 = vpop.f32.mrf.mxu0
      %v516 = vadd.f32 0.0, %v515
      %517 = vdwg.mxu0
      %v518 = vadd.f32 %v473, %v513
      %v519 = vadd.f32 %v476, %v516
      %v520 = vld [vmem:[%s3] sm:$0xff]
      %v521 = vld [vmem:[%s3 + $0x8] sm:$0xff]
      %523 = vset.pattern.permute.xlu0 0
      %524 = vperm.xlu0 %523, %v520
      %v525 = vpop.permute.xlu0 %524
      %528 = vset.pattern.permute.xlu0 0
      %529 = vperm.xlu0 %528, %v521
      %v530 = vpop.permute.xlu0 %529
      %v532 = vadd.f32 %v518, %v525
      %v533 = vadd.f32 %v519, %v530
      %v534 = vmax.f32 %v532, 0.0
      %v535 = vmax.f32 %v533, 0.0
      %v536 = vld [vmem:[%s5] sm:$0xff]
      %v537 = vld [vmem:[%s5 + $0x8] sm:$0xff]
      %v538 = vld [vmem:[%s5 + $0x10] sm:$0xff]
      %v539 = vld [vmem:[%s5 + $0x18] sm:$0xff]
      %v540 = vld [vmem:[%s5 + $0x20] sm:$0xff]
      %v541 = vld [vmem:[%s5 + $0x28] sm:$0xff]
      %vm542 = vcmask 130048
      %v544 = vsel %vm542, %v536, 0
      %v547 = vsel %vm542, %v537, 0
      %v550 = vsel %vm542, %v538, 0
      %v553 = vsel %vm542, %v539, 0
      %v556 = vsel %vm542, %v540, 0
      %v559 = vsel %vm542, %v541, 0
      %561 = vmatpush.msra.mxu0 0.0
      %562 = vmatpush.msra.mxu0 0.0
      %563 = vmatpush.msra.mxu0 0.0
      %564 = vmatpush.msra.mxu0 0.0
      %565 = vmatpush.msra.mxu0 0.0
      %566 = vmatpush.msra.mxu0 0.0
      %567 = vmatpush.msra.mxu0 0.0
      %568 = vmatpush.msra.mxu0 0.0
      %569 = vmatpush.msra.mxu0 0.0
      %570 = vmatpush.msra.mxu0 0.0
      %571 = vmatpush.msra.mxu0 0.0
      %572 = vmatpush.msra.mxu0 0.0
      %573 = vmatpush.msra.mxu0 0.0
      %574 = vmatpush.msra.mxu0 0.0
      %575 = vmatpush.msra.mxu0 %v535
      %576 = vmatpush.msra.mxu0 %v534
      %577 = vmatmul.f32.gmra.mxu0 %v544
      %v578 = vpop.f32.mrf.mxu0
      %v579 = vadd.f32 0.0, %v578
      %580 = vmatmul.f32.gmra.mxu0 %v547
      %v581 = vpop.f32.mrf.mxu0
      %v582 = vadd.f32 0.0, %v581
      %583 = vmatmul.f32.gmra.mxu0 %v550
      %v584 = vpop.f32.mrf.mxu0
      %v585 = vadd.f32 0.0, %v584
      %586 = vmatmul.f32.gmra.mxu0 %v553
      %v587 = vpop.f32.mrf.mxu0
      %v588 = vadd.f32 0.0, %v587
      %589 = vmatmul.f32.gmra.mxu0 %v556
      %v590 = vpop.f32.mrf.mxu0
      %v591 = vadd.f32 0.0, %v590
      %592 = vmatmul.f32.gmra.mxu0 %v559
      %v593 = vpop.f32.mrf.mxu0
      %v594 = vadd.f32 0.0, %v593
      %595 = vdwg.mxu0
      %v596 = vlaneseq
      %v597 = vand.u32 %v596, 127
      %v598 = vld [vmem:[%s6] sm:$0xff]
      %v599 = vld [vmem:[%s6 + $0x8] sm:$0xff]
      %601 = vset.pattern.permute.xlu0 0
      %602 = vperm.xlu0 %601, %v598
      %v603 = vpop.permute.xlu0 %602
      %606 = vset.pattern.permute.xlu0 0
      %607 = vperm.xlu0 %606, %v599
      %v608 = vpop.permute.xlu0 %607
      %v610 = vadd.f32 %v394, %v603
      %v611 = vadd.f32 %v397, %v608
      %612 = vrot.lane.b32.xlu0 %v579, 16
      %v613 = vpop.permute.xlu0 %612
      %614 = vrot.lane.b32.xlu0 %v582, 16
      %v615 = vpop.permute.xlu0 %614
      %vm616 = vcmp.ge.s32.totalorder %v597, 16
      %v617 = vsel %vm616, %v613, 0.0
      %v618 = vsel %vm616, %v615, 0.0
      %v619 = vadd.f32 %v610, %v617
      %v620 = vadd.f32 %v611, %v618
      %v621 = vadd.f32 %v619, %v585
      %v622 = vadd.f32 %v620, %v588
      %623 = vrot.lane.b32.xlu0 %v591, 112
      %v624 = vpop.permute.xlu0 %623
      %625 = vrot.lane.b32.xlu0 %v594, 112
      %v626 = vpop.permute.xlu0 %625
      %vm627 = vcmp.lt.s32.totalorder %v597, 112
      %v628 = vsel %vm627, %v624, 0.0
      %v629 = vsel %vm627, %v626, 0.0
      %v630 = vadd.f32 %v621, %v628
      %v631 = vadd.f32 %v622, %v629
      %v632 = vmax.f32 %v630, 0.0
      %v633 = vmax.f32 %v631, 0.0
      %634 = vst [vmem:[%s275] sm:$0xff] %v632
      %635 = vst [vmem:[%s275 + $0x8] sm:$0xff] %v633
      %p636 = scmp.lt.s32.totalorder %s18, 1
      %s637 = scalar_select %p636, %s18, 1
      %s638 = smul.addr %s637, 2
      %s639 = smul.addr %s638, 8
      %s640 = scalar_lea.vmem %s7, %s639
      // Predicated region
      $region49: #{st_gcn_forward.1} parent=47 // pred_check
        %p641 = pneg %p188
      $region50: #{st_gcn_forward.1} parent=47 // pred_check_branch
        %643 = sbr.rel (%p641) target = $region52
      $region51: #{st_gcn_forward.1} parent=47 // pred_region
        _
      $region52: #{st_gcn_forward.1} parent=47 // pred_fallthru
        _
    $region48: #{st_gcn_forward.1} parent=5 // pred_fallthru
      _
    %p644 = scmp.le.s32.totalorder 2, %s13
    // Predicated region
    $region53: #{st_gcn_forward.1} parent=5 // pred_check
      %p645 = pneg %p644
    $region54: #{st_gcn_forward.1} parent=5 // pred_check_branch
      %647 = sbr.rel (%p645) target = $region56
    $region55: #{st_gcn_forward.1} parent=5 // pred_region
      %s648 = ssub.s32 %s13, 2
      // Predicated region
      $region57: #{st_gcn_forward.1} parent=55 // pred_check
        %p649 = pneg %p194
      $region58: #{st_gcn_forward.1} parent=55 // pred_check_branch
        %651 = sbr.rel (%p649) target = $region60
      $region59: #{st_gcn_forward.1} parent=55 // pred_region
        %p652 = scmp.lt.s32.totalorder %s19, 1
        %s653 = scalar_select %p652, %s19, 1
        %s654 = smul.addr %s653, 2
        %s655 = smul.addr %s654, 8
        %s656 = scalar_lea.vmem %s7, %s655
      $region60: #{st_gcn_forward.1} parent=55 // pred_fallthru
        _
    $region56: #{st_gcn_forward.1} parent=5 // pred_fallthru
      _
  $region6: #{st_gcn_forward.1} parent=0 // loop_footer
    %s17 = sadd.s32 1, %s13
  $region7: #{st_gcn_forward.1} parent=0 // loop_footer_branch
    %12 = sbr.rel target = $region3
  $region8: #{st_gcn_forward.1} parent=0 // loop_exit
    _

</llo_original>
